<compile_context>
chip_gen: v7x
topology: tpu7x:2x2x1
jax: 0.10.0
libtpu: 0.0.40
codegen_flags: <defaults>
</compile_context>

<pallas_src>
import math

import jax
import jax.numpy as jnp
from jax.experimental import pallas as pl
from jax.experimental.pallas import tpu as pltpu


def _round_up(v, m):
    return ((v + m - 1) // m) * m


def _relative_position_bucket(relative_position, *, causal, num_buckets,
                              max_distance):
    """jnp transcription of T5RelativePositionBias._relative_position_bucket."""
    ret = 0
    n = -relative_position
    if not causal:
        num_buckets //= 2
        ret = ret + (n < 0).astype(jnp.int32) * num_buckets
        n = jnp.abs(n)
    else:
        n = jnp.maximum(n, 0)
    max_exact = num_buckets // 2
    is_small = n < max_exact
    # Guard log(0); the "large" branch is only selected for n >= max_exact.
    n_f = jnp.maximum(n, 1).astype(jnp.float32)
    val_if_large = max_exact + (
        jnp.log(n_f / max_exact) / math.log(max_distance / max_exact)
        * (num_buckets - max_exact)).astype(jnp.int32)
    val_if_large = jnp.minimum(val_if_large, num_buckets - 1)
    return ret + jnp.where(is_small, n, val_if_large)


def _t5_relpos_toeplitz_kernel(lo_ref, hi_ref, out_ref):
    """Expands two 1-D strip windows into one (tm, tn) Toeplitz output tile.

    Element (r, c) of this tile needs strip value P[A + c - r], where A is the
    start of the `hi` window and `lo` is the window immediately before it:
        c >= r  ->  hi[c - r]
        c <  r  ->  lo[tn + c - r]
    After a right-rotation of row r by r lanes, window position p lands in
    column (p + r) mod tn, so we select the source window *before* rolling
    (hi iff p + r < tn) and then do a single strided XLU roll whose per-row
    shift is 0 + 1 * r.
    """
    tm, tn = out_ref.shape
    lo = lo_ref[0]                                   # (1, tn) float32
    hi = hi_ref[0]                                   # (1, tn) float32
    row = jax.lax.broadcasted_iota(jnp.int32, (tm, 1), 0)
    col = jax.lax.broadcasted_iota(jnp.int32, (1, tn), 1)
    take_hi = col < (tn - row)                       # p + r < tn  -> (tm, tn)
    sel = jnp.where(take_hi, hi, lo)                 # (tm, tn) via broadcast
    # Per-row right rotation by r lanes (shift for row r = 0 + 1 * r).
    out = pltpu.roll(sel, 0, 1, stride=1, stride_axis=0)
    out_ref[...] = out.astype(out_ref.dtype)


def t5_relative_position_bias(x, emb_weight, *, scale, causal=True,
                              num_buckets=16, max_distance=50,
                              block=1024, out_dtype=jnp.float32):
    """Returns the (i, j) = x.shape[-2:] relative-position bias matrix.

    emb_weight: (num_buckets, 1) float32 embedding table (nn.Embedding weight).
    out_dtype=jnp.bfloat16 halves HBM writeback if the consumer tolerates it.
    """
    i, j = int(x.shape[-2]), int(x.shape[-1])
    emb_scaled = emb_weight.reshape(num_buckets).astype(jnp.float32) * scale

    itemsize = jnp.dtype(out_dtype).itemsize
    sub = {4: 8, 2: 16, 1: 32}.get(itemsize, 8)      # dtype-aware sublane tile

    blk = _round_up(max(int(block), 128), 128)
    tn = min(blk, _round_up(j, 128))                 # lane tile (mult of 128)
    tm = min(_round_up(i, sub), tn)                  # row tile (<= tn)
    grid_r = pl.cdiv(i, tm)
    grid_c = pl.cdiv(j, tn)
    # The strip-window index arithmetic needs r*tm to be a multiple of tn
    # whenever grid_r > 1; the sizing above guarantees tm == tn in that case
    # (and r == 0 always when grid_r == 1).
    rw = tm // tn                                    # 1 (square grid) or 0

    # 1-D per-distance strip, grouped into lane-dense tn-wide windows:
    #   window w, lane l  <->  strip index m = w*tn + l  <->  n = D - m,
    # with D = grid_r * tn, so that  bias[q, k] = strip[D + k - q].
    n_win = grid_r + grid_c
    m = jnp.arange(n_win * tn, dtype=jnp.int32)
    n = grid_r * tn - m                              # n = q - k per strip slot
    bucket = _relative_position_bucket(
        -n, causal=causal, num_buckets=num_buckets, max_distance=max_distance)
    strip = emb_scaled[bucket].reshape(n_win, 1, tn)

    cost = pl.CostEstimate(
        flops=i * j,
        transcendentals=0,
        bytes_accessed=i * j * itemsize + int(strip.size) * 4,
    )

    return pl.pallas_call(
        _t5_relpos_toeplitz_kernel,
        out_shape=jax.ShapeDtypeStruct((i, j), out_dtype),
        grid=(grid_r, grid_c),
        in_specs=[
            # "lo" window: the one immediately before this tile's row-0 window.
            pl.BlockSpec((1, 1, tn),
                         lambda r, c: (grid_r - 1 + c - r * rw, 0, 0)),
            # "hi" window: this tile's row-0 window (start A = index * tn).
            pl.BlockSpec((1, 1, tn),
                         lambda r, c: (grid_r + c - r * rw, 0, 0)),
        ],
        out_specs=pl.BlockSpec((tm, tn), lambda r, c: (r, c)),
        compiler_params=pltpu.CompilerParams(
            dimension_semantics=("parallel", "parallel"),
            vmem_limit_bytes=32 * 1024 * 1024,
        ),
        cost_estimate=cost,
    )(strip, strip)


def _reference(x, emb_weight, *, scale, causal=True, num_buckets=16,
               max_distance=50):
    """Pure-JAX reference mirroring the PyTorch forward."""
    i, j = x.shape[-2], x.shape[-1]
    q_pos = jnp.arange(i, dtype=jnp.int32)
    k_pos = jnp.arange(j, dtype=jnp.int32)
    rel_pos = k_pos[None, :] - q_pos[:, None]
    bucket = _relative_position_bucket(
        rel_pos, causal=causal, num_buckets=num_buckets,
        max_distance=max_distance)
    values = emb_weight.reshape(num_buckets)[bucket]
    return values * scale


if __name__ == "__main__":
    key = jax.random.PRNGKey(0)
    kx, ke = jax.random.split(key)

    num_buckets = 16
    max_distance = 50
    scale = 0.125  # e.g. 1/sqrt(d_k)

    # Only x.shape[-2:] matters -> (i, j) = (16, 16)
    x = jax.random.normal(kx, (2, 4, 16, 16), dtype=jnp.float32)
    emb_weight = jax.random.normal(ke, (num_buckets, 1), dtype=jnp.float32)

    # --- small causal case (module defaults) ---
    bias = t5_relative_position_bias(
        x, emb_weight, scale=scale, causal=True,
        num_buckets=num_buckets, max_distance=max_distance)
    bias = jax.block_until_ready(bias)
    ref = _reference(x, emb_weight, scale=scale, causal=True,
                     num_buckets=num_buckets, max_distance=max_distance)
    assert bias.shape == (16, 16) and bias.dtype == jnp.float32
    assert jnp.allclose(bias, ref, atol=1e-6), "causal (16,16) mismatch"

    # --- small non-causal case ---
    bias_nc = t5_relative_position_bias(
        x, emb_weight, scale=scale, causal=False,
        num_buckets=num_buckets, max_distance=max_distance)
    bias_nc = jax.block_until_ready(bias_nc)
    ref_nc = _reference(x, emb_weight, scale=scale, causal=False,
                        num_buckets=num_buckets, max_distance=max_distance)
    assert jnp.allclose(bias_nc, ref_nc, atol=1e-6), "non-causal mismatch"

    # --- bf16 output (halves HBM writeback; dtype-aware sublane tiling) ---
    bias_bf16 = t5_relative_position_bias(
        x, emb_weight, scale=scale, causal=True,
        num_buckets=num_buckets, max_distance=max_distance,
        out_dtype=jnp.bfloat16)
    bias_bf16 = jax.block_until_ready(bias_bf16)
    assert bias_bf16.dtype == jnp.bfloat16
    assert jnp.allclose(bias_bf16.astype(jnp.float32), ref, atol=1e-2), \
        "bf16 causal mismatch"

    # --- larger causal case: multi-tile 2-D grid (2 x 3), ragged edge tiles,
    #     and strip-window index arithmetic across row/column tiles ---
    i2, j2 = 300, 640
    x2 = jnp.zeros((1, 1, i2, j2), dtype=jnp.float32)
    bias2 = t5_relative_position_bias(
        x2, emb_weight, scale=scale, causal=True,
        num_buckets=num_buckets, max_distance=max_distance, block=256)
    bias2 = jax.block_until_ready(bias2)
    ref2 = _reference(x2, emb_weight, scale=scale, causal=True,
                      num_buckets=num_buckets, max_distance=max_distance)
    assert bias2.shape == (i2, j2) and bias2.dtype == jnp.float32
    assert jnp.allclose(bias2, ref2, atol=1e-6), "large causal mismatch"

    # --- larger non-causal case at a different tile size (single row tile,
    #     tm != tn path) ---
    bias3 = t5_relative_position_bias(
        x2, emb_weight, scale=scale, causal=False,
        num_buckets=num_buckets, max_distance=max_distance, block=512)
    bias3 = jax.block_until_ready(bias3)
    ref3 = _reference(x2, emb_weight, scale=scale, causal=False,
                      num_buckets=num_buckets, max_distance=max_distance)
    assert jnp.allclose(bias3, ref3, atol=1e-6), "large non-causal mismatch"

    print("KERNEL_OK")
</pallas_src>

<mosaic_0001>
module attributes {stable_mosaic.version = 11 : i64} {
  func.func @_t5_relpos_toeplitz_kernel(%arg0: i32, %arg1: i32, %arg2: memref<1x1x128xf32, #tpu.memory_space<vmem>>, %arg3: memref<1x1x128xf32, #tpu.memory_space<vmem>>, %arg4: memref<16x128xf32, #tpu.memory_space<vmem>>) attributes {dimension_semantics = [#tpu.dimension_semantics<parallel>, #tpu.dimension_semantics<parallel>], iteration_bounds = array<i64: 1, 1>, scalar_prefetch = 0 : i64, scratch_operands = 0 : i64, tpu.core_type = #tpu.core_type<tc>, window_params = [{transform_indices = @transform_0, window_bounds = array<i64: 1, 1, 128>}, {transform_indices = @transform_1, window_bounds = array<i64: 1, 1, 128>}, {transform_indices = @transform_2, window_bounds = array<i64: 16, 128>}]} {
    %c0 = arith.constant 0 : index
    %c0_0 = arith.constant 0 : index
    %c0_1 = arith.constant 0 : index
    %0 = vector.load %arg2[%c0, %c0_0, %c0_1] : memref<1x1x128xf32, #tpu.memory_space<vmem>>, vector<1x1x128xf32>
    %1 = vector.shape_cast %0 : vector<1x1x128xf32> to vector<1x128xf32>
    %c0_2 = arith.constant 0 : index
    %c0_3 = arith.constant 0 : index
    %c0_4 = arith.constant 0 : index
    %2 = vector.load %arg3[%c0_2, %c0_3, %c0_4] : memref<1x1x128xf32, #tpu.memory_space<vmem>>, vector<1x1x128xf32>
    %3 = vector.shape_cast %2 : vector<1x1x128xf32> to vector<1x128xf32>
    %4 = tpu.iota {dimensions = array<i32: 0>} : vector<16x1xi32>
    %5 = tpu.iota {dimensions = array<i32: 1>} : vector<1x128xi32>
    %c128_i32 = arith.constant 128 : i32
    %6 = vector.broadcast %c128_i32 : i32 to vector<16x1xi32>
    %7 = arith.subi %6, %4 : vector<16x1xi32>
    %8 = vector.broadcast %5 : vector<1x128xi32> to vector<16x128xi32>
    %9 = vector.broadcast %7 : vector<16x1xi32> to vector<16x128xi32>
    %10 = arith.cmpi slt, %8, %9 : vector<16x128xi32>
    %11 = vector.shape_cast %3 : vector<1x128xf32> to vector<1x128xf32>
    %12 = vector.broadcast %11 : vector<1x128xf32> to vector<16x128xf32>
    %13 = vector.shape_cast %1 : vector<1x128xf32> to vector<1x128xf32>
    %14 = vector.broadcast %13 : vector<1x128xf32> to vector<16x128xf32>
    %15 = arith.select %10, %12, %14 : vector<16x128xi1>, vector<16x128xf32>
    %c0_i32 = arith.constant 0 : i32
    %16 = tpu.dynamic_rotate %15 by %c0_i32 dim 1 {stride = 1 : si32, stride_dimension = 0 : si32} : vector<16x128xf32>, i32 -> vector<16x128xf32>
    %c0_5 = arith.constant 0 : index
    %c0_6 = arith.constant 0 : index
    %17 = vector.load %arg4[%c0_5, %c0_6] : memref<16x128xf32, #tpu.memory_space<vmem>>, vector<16x128xf32>
    tpu.vector_store %arg4[%c0_5, %c0_6], %16 {strides = array<i32>} : memref<16x128xf32, #tpu.memory_space<vmem>>, vector<16x128xf32>,
    return
  }
  func.func @transform_0(%arg0: i32, %arg1: i32) -> (i32, i32, i32) {
    %c0_i32 = arith.constant 0 : i32
    %0 = arith.addi %c0_i32, %arg1 : i32
    %c0_i32_0 = arith.constant 0 : i32
    %1 = arith.muli %arg0, %c0_i32_0 : i32
    %2 = arith.subi %0, %1 : i32
    %c0_i32_1 = arith.constant 0 : i32
    %c0_i32_2 = arith.constant 0 : i32
    %c0_i32_3 = arith.constant 0 : i32
    return %2, %c0_i32_1, %c0_i32_2 : i32, i32, i32
  }
  func.func @transform_1(%arg0: i32, %arg1: i32) -> (i32, i32, i32) {
    %c1_i32 = arith.constant 1 : i32
    %0 = arith.addi %c1_i32, %arg1 : i32
    %c0_i32 = arith.constant 0 : i32
    %1 = arith.muli %arg0, %c0_i32 : i32
    %2 = arith.subi %0, %1 : i32
    %c0_i32_0 = arith.constant 0 : i32
    %c0_i32_1 = arith.constant 0 : i32
    %c0_i32_2 = arith.constant 0 : i32
    return %2, %c0_i32_0, %c0_i32_1 : i32, i32, i32
  }
  func.func @transform_2(%arg0: i32, %arg1: i32) -> (i32, i32) {
    %c0_i32 = arith.constant 0 : i32
    return %arg0, %arg1 : i32, i32
  }
}

</mosaic_0001>

<llo_original>
// kernel: tpu_custom_call.1
$region0: #{tpu_custom_call.1}
  #allocation0 [shape = 'u32[]', space=smem, size = 0x4, offset = 0x4, fixed_abs, tag = 'smem constant byte address 0x4 - core index']
  #allocation1 [shape = 'u32[144,128]{1,0:T(1,128)}', space=vmem, size = 0x12000, scoped, tag = 'internal scratch']
  %s0 = inlined_call_operand.hbm [shape: f32[2,1,128], index: 0, kind: input, shape index: {}]
  %s1 = inlined_call_operand.vmem [shape: f32[2,1,128], index: 1, kind: input, shape index: {}]
  %s2 = inlined_call_operand.hbm [shape: f32[16,16], index: 2, kind: output, shape index: {}]
  %s3 = sld [smem:[#allocation0]]
  $region22: #{tpu_custom_call.1} parent=0
    _
  %s5 = ssub.s32 1, %s3
  %s6 = scalar_select 0, %s5, %s3
  $region1: #{tpu_custom_call.1} parent=0
    #allocation2 [shape = 'u8[512]{0}', space=vmem, size = 0x400, scoped, tag = 'input window, operand 0, single buffered']
    #allocation3 [shape = 's32[1]{0}', space=sflag, size = 0x4, scoped, tag = 'scoped memory for tpu_custom_call.1']
    #allocation4 [shape = 's32[1]{0}', space=sflag, size = 0x4, scoped, tag = 'scoped memory for tpu_custom_call.1']
    #allocation5 [shape = 'u8[8192]{0}', space=vmem, size = 0x2000, scoped, tag = 'output window, operand 0, single buffered']
    %7 = vsyncpa [#allocation3], 0
    %8 = vsyncpa [#allocation4], 0
    // Predicated region
    $region2: #{tpu_custom_call.1} parent=1 // pred_check
      _
    $region3: #{tpu_custom_call.1} parent=1 // pred_check_branch
      %10 = sbr.rel (0) target = $region5
    $region4: #{tpu_custom_call.1} parent=1 // pred_region
      %s12 = ssub.s32 16, 16
      %13 = vsyncadd [#allocation3], %s12
      %s15 = sshll.u32 [#allocation2], 4
      %s16 = int_to_ptr.vmem [resolvable:$true] %s15
      %18 = dma.hbm_to_vmem [thread:$0]  %s0, 16, %s16, [#allocation3]
    $region5: #{tpu_custom_call.1} parent=1 // pred_fallthru
      _
    // Predicated region
    $region6: #{tpu_custom_call.1} parent=1 // pred_check
      _
    $region7: #{tpu_custom_call.1} parent=1 // pred_check_branch
      %20 = sbr.rel (0) target = $region9
    $region8: #{tpu_custom_call.1} parent=1 // pred_region
      %s21 = sadd.s32 0, 1
      %p22 = scmp.lt.s32.totalorder %s21, 1
      %s23 = scalar_select %p22, %s21, 1
      %s24 = scalar_lea.vmem %s1, %s23
      %s25 = sadd.s32 0, 1
    $region9: #{tpu_custom_call.1} parent=1 // pred_fallthru
      _
    // Predicated region
    $region10: #{tpu_custom_call.1} parent=1 // pred_check
      _
    $region11: #{tpu_custom_call.1} parent=1 // pred_check_branch
      %27 = sbr.rel (0) target = $region13
    $region12: #{tpu_custom_call.1} parent=1 // pred_region
      %28 = dma.done [#allocation3], 16
    $region13: #{tpu_custom_call.1} parent=1 // pred_fallthru
      _
    %s29 = sadd.s32 0, 1
    %p30 = scmp.lt.s32.totalorder %s29, 1
    %s31 = scalar_select %p30, %s29, 1
    %s32 = scalar_lea.vmem %s1, %s31
    %s33 = sadd.s32 0, 1
    %p34 = scmp.lt.s32.totalorder %s33, 1
    %s35 = scalar_select %p34, %s33, 1
    %s36 = scalar_lea.vmem %s1, %s35
    %s37 = sadd.s32 0, 1
    %v38 = vld [vmem:[#allocation2] sm:$0x1]
    %v39 = vld [vmem:[%s36] sm:$0x1]
    %v40 = vlaneseq
    %v41 = vshrl.u32 %v40, 7
    %v42 = vadd.s32 %v41, 8
    %v43 = vlaneseq
    %v44 = vand.u32 %v43, 127
    %v45 = vsub.s32 128, %v41
    %v46 = vsub.s32 128, %v42
    %vm47 = vcmp.lt.s32.totalorder %v44, %v45
    %vm48 = vcmp.lt.s32.totalorder %v44, %v46
    %v50 = vlaneseq
    %v51 = vshrl.u32 %v50, 7
    %v52 = vsub.s32 0, %v51
    %v53 = vrot.slane %v39, %v52
    %v56 = vlaneseq
    %v57 = vshrl.u32 %v56, 7
    %v58 = vsub.s32 0, %v57
    %v59 = vrot.slane %v38, %v58
    %v61 = vsel %vm47, %v53, %v59
    %v62 = vsel %vm48, %v53, %v59
    %64 = vrot.lane.b32.xlu0 %v61, 256
    %v65 = vpop.permute.xlu0 %64
    %s67 = sor.u32 256, 8
    %68 = vrot.lane.b32.xlu0 %v62, %s67
    %v69 = vpop.permute.xlu0 %68
    %70 = vst [vmem:[#allocation5] sm:$0xff] %v65
    %71 = vst [vmem:[#allocation5 + $0x8] sm:$0xff] %v69
    // Predicated region
    $region14: #{tpu_custom_call.1} parent=1 // pred_check
      _
    $region15: #{tpu_custom_call.1} parent=1 // pred_check_branch
      %73 = sbr.rel (0) target = $region17
    $region16: #{tpu_custom_call.1} parent=1 // pred_region
      %s75 = ssub.s32 256, 256
      %76 = vsyncadd [#allocation4], %s75
      %s77 = sshll.u32 [#allocation5], 4
      %s78 = int_to_ptr.vmem [resolvable:$true] %s77
      %83 = dma.vmem_to_hbm [thread:$0]  %s78, 256, %s2, [#allocation4], 128, 128, 8
    $region17: #{tpu_custom_call.1} parent=1 // pred_fallthru
      _
    // Predicated region
    $region18: #{tpu_custom_call.1} parent=1 // pred_check
      _
    $region19: #{tpu_custom_call.1} parent=1 // pred_check_branch
      %85 = sbr.rel (0) target = $region21
    $region20: #{tpu_custom_call.1} parent=1 // pred_region
      %86 = dma.done [#allocation4], 256
    $region21: #{tpu_custom_call.1} parent=1 // pred_fallthru
      _
    %87 = vsyncpa [#allocation3], 1
    %88 = vsyncpa [#allocation4], 1

</llo_original>
